<compile_context>
chip_gen: v6e
topology: v6e:2x2x1
jax: 0.10.0
libtpu: 0.0.40
codegen_flags: <defaults>
</compile_context>

<pallas_src>
import functools

import jax
import jax.numpy as jnp
from jax.experimental import pallas as pl
from jax.experimental.pallas import tpu as pltpu

_NEG_BIG = -1.0e30  # padded-logit bias -> exp underflows to exactly 0


def _round_up(n, m):
    return ((n + m - 1) // m) * m


def _cdiv(a, b):
    return (a + b - 1) // b


# --------------------------------------------------------------------------- #
# One-time parameter preprocessing (hoisted out of the per-call hot path).
# --------------------------------------------------------------------------- #
def prepare_params(w1, b1, w2, b2, matmul_dtype=jnp.bfloat16):
    """Preprocess PyTorch-layout Linear params once at init time.

    w1: (h, s), b1: (h,), w2: (a, h), b2: (a,)  ->
      w1_t: (s, h)   cast to matmul_dtype
      b1_r: (1, h)   f32
      w2_t: (h, A)   A = a padded up to a multiple of 128 lanes (zero pad)
      b2_r: (1, A)   f32; padded columns biased to -1e30 (softmax prob == 0)
    The 128-lane padding exists only for in-kernel (VMEM/vreg) compute; the
    kernel stores just the first a columns to HBM.
    """
    s = w1.shape[1]
    h = w1.shape[0]
    a = w2.shape[0]
    A = _round_up(max(a, 128), 128)

    w1_t = w1.T.astype(matmul_dtype)                                   # (s, h)
    w2_t = jnp.zeros((h, A), matmul_dtype).at[:, :a].set(
        w2.T.astype(matmul_dtype))                                     # (h, A)
    b1_r = b1.reshape(1, h).astype(jnp.float32)                        # (1, h)
    b2_r = jnp.full((1, A), _NEG_BIG, jnp.float32).at[0, :a].set(
        b2.astype(jnp.float32))                                        # (1, A)
    return {"w1_t": w1_t, "b1_r": b1_r, "w2_t": w2_t, "b2_r": b2_r, "a_size": a}


# --------------------------------------------------------------------------- #
# Kernel: one batch tile per grid step; weights VMEM-resident across steps.
# --------------------------------------------------------------------------- #
def _policy_kernel(x_ref, w1_ref, b1_ref, w2_ref, b2_ref, out_ref, *, a_size):
    # fc1 + ReLU  (MXU matmul in w1 dtype, f32 accumulate; elementwise in f32)
    x = x_ref[...].astype(w1_ref.dtype)                                 # (TB, S)
    h = jnp.dot(x, w1_ref[...], preferred_element_type=jnp.float32) + b1_ref[...]
    h = jnp.maximum(h, 0.0)                                             # (TB, H) f32

    # fc2 into the 128-lane-padded logit slab (VMEM-only; never stored to HBM).
    logits = jnp.dot(h.astype(w2_ref.dtype), w2_ref[...],
                     preferred_element_type=jnp.float32) + b2_ref[...]  # (TB, A)

    # Numerically stable softmax over the last (lane) axis == torch dim=1.
    # Padded columns carry a -1e30 bias, so exp(...) == 0 there and they do
    # not perturb the max or the denominator.
    m = jnp.max(logits, axis=-1, keepdims=True)
    e = jnp.exp(logits - m)
    denom = jnp.sum(e, axis=-1, keepdims=True)

    # Exact normalization (rows sum to 1 within f32 rounding) and a narrow
    # store of only the real a_size columns.
    out_ref[...] = (e[:, :a_size] / denom).astype(out_ref.dtype)


# --------------------------------------------------------------------------- #
# Wrapper
# --------------------------------------------------------------------------- #
def policy_forward(x, params, *, block_b=2048):
    """x: (B, s_size) f32.  params: output of prepare_params()."""
    w1_t, b1_r = params["w1_t"], params["b1_r"]
    w2_t, b2_r = params["w2_t"], params["b2_r"]
    a_size = params["a_size"]

    B, s = x.shape
    h = w1_t.shape[1]
    A = w2_t.shape[1]

    # Batch tile: multiple of 8 sublanes, capped at block_b, and chosen so the
    # batch splits into >=2 grid steps when B is large enough (so the
    # "parallel" axis can use both TensorCores on v7x).  No explicit padding:
    # the ragged last block is handled by Pallas (row-wise math, masked store).
    tb = min(block_b, max(8, _round_up(_cdiv(B, 2), 8)))
    tb = _round_up(tb, 8)
    grid = (_cdiv(B, tb),)

    itemsize = jnp.dtype(x.dtype).itemsize
    cost = pl.CostEstimate(
        flops=2 * B * (s * h + h * A),
        transcendentals=B * A,
        bytes_accessed=(B * (s * itemsize + a_size * 4)
                        + w1_t.size * jnp.dtype(w1_t.dtype).itemsize
                        + w2_t.size * jnp.dtype(w2_t.dtype).itemsize
                        + (b1_r.size + b2_r.size) * 4),
    )

    out = pl.pallas_call(
        functools.partial(_policy_kernel, a_size=a_size),
        out_shape=jax.ShapeDtypeStruct((B, a_size), jnp.float32),
        grid_spec=pltpu.PrefetchScalarGridSpec(
            num_scalar_prefetch=0,
            grid=grid,
            in_specs=[
                pl.BlockSpec((tb, s), lambda i: (i, 0)),        # x: tiled over batch
                pl.BlockSpec(w1_t.shape, lambda i: (0, 0)),     # weights: VMEM-resident
                pl.BlockSpec(b1_r.shape, lambda i: (0, 0)),
                pl.BlockSpec(w2_t.shape, lambda i: (0, 0)),
                pl.BlockSpec(b2_r.shape, lambda i: (0, 0)),
            ],
            out_specs=pl.BlockSpec((tb, a_size), lambda i: (i, 0)),  # narrow output
        ),
        compiler_params=pltpu.CompilerParams(
            # Megacore sharding on v7x; no vmem_limit_bytes needed — even at
            # tb=4096 the double-buffered working set is only a few MiB.
            dimension_semantics=("parallel",)),
        cost_estimate=cost,
    )(x, w1_t, b1_r, w2_t, b2_r)

    return out


# --------------------------------------------------------------------------- #
# Reference & init helpers
# --------------------------------------------------------------------------- #
def init_linear(key, in_features, out_features):
    """Mimic torch.nn.Linear default init (uniform +-1/sqrt(fan_in))."""
    kw, kb = jax.random.split(key)
    bound = 1.0 / jnp.sqrt(jnp.float32(in_features))
    w = jax.random.uniform(kw, (out_features, in_features), jnp.float32, -bound, bound)
    b = jax.random.uniform(kb, (out_features,), jnp.float32, -bound, bound)
    return w, b


def reference_forward(x, w1, b1, w2, b2):
    h = jnp.maximum(x @ w1.T + b1, 0.0)
    logits = h @ w2.T + b2
    return jax.nn.softmax(logits, axis=1)


# TODO(synk): Policy.act() (epsilon-greedy / Categorical sampling via host-side
# Python `random`) is not part of forward(); sampling/argmax could be fused
# into the kernel epilogue later to shrink output to a couple of bytes per row.

if __name__ == "__main__":
    # Shapes consistent with the module: s_size=16, h_size=32, a_size=6.
    B, s_size, h_size, a_size = 2, 16, 32, 6

    key = jax.random.PRNGKey(0)
    k_x, k_fc1, k_fc2, k_xb = jax.random.split(key, 4)

    x = jax.random.normal(k_x, (B, s_size), jnp.float32)
    w1, b1 = init_linear(k_fc1, s_size, h_size)
    w2, b2 = init_linear(k_fc2, h_size, a_size)

    # ---- f32-matmul path (tiny batch, single grid step) --------------------
    params_f32 = prepare_params(w1, b1, w2, b2, matmul_dtype=jnp.float32)
    probs = jax.block_until_ready(policy_forward(x, params_f32))

    ref = reference_forward(x, w1, b1, w2, b2)
    assert probs.shape == (B, a_size)
    assert jnp.allclose(probs, ref, atol=1e-3, rtol=1e-3), "f32 path mismatch vs reference"
    assert jnp.allclose(jnp.sum(probs, axis=1), 1.0, atol=1e-4), "rows must sum to 1"

    # ---- default bf16-matmul path at a ragged, multi-step batch -------------
    Bb = 1000  # not a multiple of the batch tile -> exercises the ragged last block
    xb = jax.random.normal(k_xb, (Bb, s_size), jnp.float32)
    params_bf16 = prepare_params(w1, b1, w2, b2)  # default: bf16 MXU operands
    probs_b = jax.block_until_ready(policy_forward(xb, params_bf16, block_b=256))

    ref_b = reference_forward(xb, w1, b1, w2, b2)
    assert probs_b.shape == (Bb, a_size)
    assert jnp.allclose(probs_b, ref_b, atol=2e-2, rtol=2e-2), "bf16 path mismatch vs reference"
    assert jnp.allclose(jnp.sum(probs_b, axis=1), 1.0, atol=1e-3), "rows must sum to 1"

    print("KERNEL_OK")
</pallas_src>

<mosaic_0001>
module attributes {stable_mosaic.version = 11 : i64} {
  func.func @_policy_kernel(%arg0: i32, %arg1: memref<8x16xf32, #tpu.memory_space<vmem>>, %arg2: memref<16x32xf32, #tpu.memory_space<vmem>>, %arg3: memref<1x32xf32, #tpu.memory_space<vmem>>, %arg4: memref<32x128xf32, #tpu.memory_space<vmem>>, %arg5: memref<1x128xf32, #tpu.memory_space<vmem>>, %arg6: memref<8x6xf32, #tpu.memory_space<vmem>>) attributes {dimension_semantics = [#tpu.dimension_semantics<parallel>], iteration_bounds = array<i64: 1>, scalar_prefetch = 0 : i64, scratch_operands = 0 : i64, tpu.core_type = #tpu.core_type<tc>, window_params = [{transform_indices = @transform_0, window_bounds = array<i64: 8, 16>}, {pipeline_mode = #tpu.pipeline_mode<synchronous>, transform_indices = @transform_1, window_bounds = array<i64: 16, 32>}, {pipeline_mode = #tpu.pipeline_mode<synchronous>, transform_indices = @transform_2, window_bounds = array<i64: 1, 32>}, {pipeline_mode = #tpu.pipeline_mode<synchronous>, transform_indices = @transform_3, window_bounds = array<i64: 32, 128>}, {pipeline_mode = #tpu.pipeline_mode<synchronous>, transform_indices = @transform_4, window_bounds = array<i64: 1, 128>}, {transform_indices = @transform_5, window_bounds = array<i64: 8, 6>}]} {
    %c0 = arith.constant 0 : index
    %c0_0 = arith.constant 0 : index
    %0 = vector.load %arg1[%c0, %c0_0] : memref<8x16xf32, #tpu.memory_space<vmem>>, vector<8x16xf32>
    %c0_1 = arith.constant 0 : index
    %c0_2 = arith.constant 0 : index
    %1 = vector.load %arg2[%c0_1, %c0_2] : memref<16x32xf32, #tpu.memory_space<vmem>>, vector<16x32xf32>
    %cst = arith.constant dense<0.000000e+00> : vector<8x32xf32>
    %2 = tpu.matmul %0, %1, %cst {dimension_numbers = #tpu.dot_dimension_numbers<[1], [0], [0], [1], [0, 0, 1, 1], [], []>} : vector<8x16xf32>, vector<16x32xf32>, vector<8x32xf32> -> vector<8x32xf32>
    %c0_3 = arith.constant 0 : index
    %c0_4 = arith.constant 0 : index
    %3 = vector.load %arg3[%c0_3, %c0_4] : memref<1x32xf32, #tpu.memory_space<vmem>>, vector<1x32xf32>
    %4 = vector.broadcast %3 : vector<1x32xf32> to vector<8x32xf32>
    %5 = arith.addf %2, %4 : vector<8x32xf32>
    %cst_5 = arith.constant 0.000000e+00 : f32
    %6 = vector.broadcast %cst_5 : f32 to vector<8x32xf32>
    %7 = arith.maximumf %5, %6 : vector<8x32xf32>
    %c0_6 = arith.constant 0 : index
    %c0_7 = arith.constant 0 : index
    %8 = vector.load %arg4[%c0_6, %c0_7] : memref<32x128xf32, #tpu.memory_space<vmem>>, vector<32x128xf32>
    %cst_8 = arith.constant dense<0.000000e+00> : vector<8x128xf32>
    %9 = tpu.matmul %7, %8, %cst_8 {dimension_numbers = #tpu.dot_dimension_numbers<[1], [0], [0], [1], [0, 0, 1, 1], [], []>} : vector<8x32xf32>, vector<32x128xf32>, vector<8x128xf32> -> vector<8x128xf32>
    %c0_9 = arith.constant 0 : index
    %c0_10 = arith.constant 0 : index
    %10 = vector.load %arg5[%c0_9, %c0_10] : memref<1x128xf32, #tpu.memory_space<vmem>>, vector<1x128xf32>
    %11 = vector.broadcast %10 : vector<1x128xf32> to vector<8x128xf32>
    %12 = arith.addf %9, %11 : vector<8x128xf32>
    %cst_11 = arith.constant dense<0xFF800000> : vector<8xf32>
    %13 = vector.multi_reduction <maximumf>, %12, %cst_11 [1] : vector<8x128xf32> to vector<8xf32>
    %14 = vector.shape_cast %13 : vector<8xf32> to vector<8x1xf32>
    %15 = vector.broadcast %14 : vector<8x1xf32> to vector<8x128xf32>
    %16 = arith.subf %12, %15 : vector<8x128xf32>
    %17 = math.exp %16 : vector<8x128xf32>
    %cst_12 = arith.constant dense<0.000000e+00> : vector<8xf32>
    %18 = vector.multi_reduction <add>, %17, %cst_12 [1] : vector<8x128xf32> to vector<8xf32>
    %19 = vector.shape_cast %18 : vector<8xf32> to vector<8x1xf32>
    %20 = vector.extract_strided_slice %17 {offsets = [0, 0], sizes = [8, 6], strides = [1, 1]} : vector<8x128xf32> to vector<8x6xf32>
    %21 = vector.broadcast %19 : vector<8x1xf32> to vector<8x6xf32>
    %22 = arith.divf %20, %21 : vector<8x6xf32>
    %c0_13 = arith.constant 0 : index
    %c0_14 = arith.constant 0 : index
    %23 = vector.load %arg6[%c0_13, %c0_14] : memref<8x6xf32, #tpu.memory_space<vmem>>, vector<8x6xf32>
    tpu.vector_store %arg6[%c0_13, %c0_14], %22 {strides = array<i32>} : memref<8x6xf32, #tpu.memory_space<vmem>>, vector<8x6xf32>,
    return
  }
  func.func @transform_0(%arg0: i32) -> (i32, i32) {
    %c0_i32 = arith.constant 0 : i32
    %c0_i32_0 = arith.constant 0 : i32
    return %arg0, %c0_i32 : i32, i32
  }
  func.func @transform_1(%arg0: i32) -> (i32, i32) {
    %c0_i32 = arith.constant 0 : i32
    %c0_i32_0 = arith.constant 0 : i32
    %c0_i32_1 = arith.constant 0 : i32
    return %c0_i32, %c0_i32_0 : i32, i32
  }
  func.func @transform_2(%arg0: i32) -> (i32, i32) {
    %c0_i32 = arith.constant 0 : i32
    %c0_i32_0 = arith.constant 0 : i32
    %c0_i32_1 = arith.constant 0 : i32
    return %c0_i32, %c0_i32_0 : i32, i32
  }
  func.func @transform_3(%arg0: i32) -> (i32, i32) {
    %c0_i32 = arith.constant 0 : i32
    %c0_i32_0 = arith.constant 0 : i32
    %c0_i32_1 = arith.constant 0 : i32
    return %c0_i32, %c0_i32_0 : i32, i32
  }
  func.func @transform_4(%arg0: i32) -> (i32, i32) {
    %c0_i32 = arith.constant 0 : i32
    %c0_i32_0 = arith.constant 0 : i32
    %c0_i32_1 = arith.constant 0 : i32
    return %c0_i32, %c0_i32_0 : i32, i32
  }
  func.func @transform_5(%arg0: i32) -> (i32, i32) {
    %c0_i32 = arith.constant 0 : i32
    %c0_i32_0 = arith.constant 0 : i32
    return %arg0, %c0_i32 : i32, i32
  }
}

</mosaic_0001>

<llo_original>
// kernel: tpu_custom_call.1
$region0: #{tpu_custom_call.1}
  #allocation0 [shape = 'u32[]', space=smem, size = 0x4, offset = 0x4, fixed_abs, tag = 'smem constant byte address 0x4 - core index']
  #allocation1 [shape = 'u32[144,128]{1,0:T(1,128)}', space=vmem, size = 0x12000, scoped, tag = 'internal scratch']
  %s0 = inlined_call_operand.hbm [shape: f32[2,16], index: 0, kind: input, shape index: {}]
  %s1 = inlined_call_operand.hbm [shape: f32[16,32], index: 1, kind: input, shape index: {}]
  %s2 = inlined_call_operand.vmem [shape: f32[1,32], index: 2, kind: input, shape index: {}]
  %s3 = inlined_call_operand.hbm [shape: f32[32,128], index: 3, kind: input, shape index: {}]
  %s4 = inlined_call_operand.vmem [shape: f32[1,128], index: 4, kind: input, shape index: {}]
  %s5 = inlined_call_operand.hbm [shape: f32[2,6], index: 5, kind: output, shape index: {}]
  %s6 = sld [smem:[#allocation0]]
  $region42: #{tpu_custom_call.1} parent=0
    _
  %s8 = ssub.s32 1, %s6
  %s9 = scalar_select 0, %s8, %s6
  $region1: #{tpu_custom_call.1} parent=0
    #allocation2 [shape = 'u8[4096]{0}', space=vmem, size = 0x1000, scoped, tag = 'input window, operand 0, single buffered']
    #allocation3 [shape = 's32[1]{0}', space=sflag, size = 0x4, scoped, tag = 'scoped memory for tpu_custom_call.1']
    #allocation4 [shape = 's32[1]{0}', space=sflag, size = 0x4, scoped, tag = 'scoped memory for tpu_custom_call.1']
    #allocation5 [shape = 'u8[8192]{0}', space=vmem, size = 0x2000, scoped, tag = 'input window, operand 1, single buffered']
    #allocation6 [shape = 's32[1]{0}', space=sflag, size = 0x4, scoped, tag = 'scoped memory for tpu_custom_call.1']
    #allocation7 [shape = 'u8[16384]{0}', space=vmem, size = 0x4000, scoped, tag = 'input window, operand 3, single buffered']
    #allocation8 [shape = 'u8[4096]{0}', space=vmem, size = 0x1000, scoped, tag = 'output window, operand 0, single buffered']
    %10 = vsyncpa [#allocation3], 0
    %11 = vsyncpa [#allocation6], 0
    %12 = vsyncpa [#allocation4], 0
    // Predicated region
    $region2: #{tpu_custom_call.1} parent=1 // pred_check
      _
    $region3: #{tpu_custom_call.1} parent=1 // pred_check_branch
      %14 = sbr.rel (0) target = $region5
    $region4: #{tpu_custom_call.1} parent=1 // pred_region
      %s16 = ssub.s32 128, 32
      %17 = vsyncadd [#allocation3], %s16
      %s18 = sshll.u32 [#allocation2], 4
      %s19 = int_to_ptr.vmem [resolvable:$true] %s18
      %24 = dma.hbm_to_vmem [thread:$0]  %s0, 32, %s19, [#allocation3], 32, 32, 2
    $region5: #{tpu_custom_call.1} parent=1 // pred_fallthru
      _
    // Predicated region
    $region6: #{tpu_custom_call.1} parent=1 // pred_check
      _
    $region7: #{tpu_custom_call.1} parent=1 // pred_check_branch
      %26 = sbr.rel (0) target = $region9
    $region8: #{tpu_custom_call.1} parent=1 // pred_region
      %s28 = ssub.s32 256, 256
      %29 = vsyncadd [#allocation6], %s28
      %s30 = sshll.u32 [#allocation5], 4
      %s31 = int_to_ptr.vmem [resolvable:$true] %s30
      %36 = dma.hbm_to_vmem [thread:$0]  %s1, 256, %s31, [#allocation6], 128, 128, 8
    $region9: #{tpu_custom_call.1} parent=1 // pred_fallthru
      _
    // Predicated region
    $region10: #{tpu_custom_call.1} parent=1 // pred_check
      _
    $region11: #{tpu_custom_call.1} parent=1 // pred_check_branch
      %38 = sbr.rel (0) target = $region13
    $region12: #{tpu_custom_call.1} parent=1 // pred_region
      _
    $region13: #{tpu_custom_call.1} parent=1 // pred_fallthru
      _
    // Predicated region
    $region14: #{tpu_custom_call.1} parent=1 // pred_check
      _
    $region15: #{tpu_custom_call.1} parent=1 // pred_check_branch
      %40 = sbr.rel (0) target = $region17
    $region16: #{tpu_custom_call.1} parent=1 // pred_region
      %s42 = ssub.s32 512, 512
      %43 = vsyncadd [#allocation6], %s42
      %s44 = sshll.u32 [#allocation7], 4
      %s45 = int_to_ptr.vmem [resolvable:$true] %s44
      %50 = dma.hbm_to_vmem [thread:$0]  %s3, 512, %s45, [#allocation6], 128, 128, 8
    $region17: #{tpu_custom_call.1} parent=1 // pred_fallthru
      _
    // Predicated region
    $region18: #{tpu_custom_call.1} parent=1 // pred_check
      _
    $region19: #{tpu_custom_call.1} parent=1 // pred_check_branch
      %52 = sbr.rel (0) target = $region21
    $region20: #{tpu_custom_call.1} parent=1 // pred_region
      _
    $region21: #{tpu_custom_call.1} parent=1 // pred_fallthru
      _
    // Predicated region
    $region22: #{tpu_custom_call.1} parent=1 // pred_check
      _
    $region23: #{tpu_custom_call.1} parent=1 // pred_check_branch
      %54 = sbr.rel (0) target = $region25
    $region24: #{tpu_custom_call.1} parent=1 // pred_region
      %55 = dma.done [#allocation3], 128
    $region25: #{tpu_custom_call.1} parent=1 // pred_fallthru
      _
    // Predicated region
    $region26: #{tpu_custom_call.1} parent=1 // pred_check
      _
    $region27: #{tpu_custom_call.1} parent=1 // pred_check_branch
      %57 = sbr.rel (0) target = $region29
    $region28: #{tpu_custom_call.1} parent=1 // pred_region
      %58 = dma.done [#allocation6], 256
    $region29: #{tpu_custom_call.1} parent=1 // pred_fallthru
      _
    // Predicated region
    $region30: #{tpu_custom_call.1} parent=1 // pred_check
      _
    $region31: #{tpu_custom_call.1} parent=1 // pred_check_branch
      %60 = sbr.rel (0) target = $region33
    $region32: #{tpu_custom_call.1} parent=1 // pred_region
      %61 = dma.done [#allocation6], 512
    $region33: #{tpu_custom_call.1} parent=1 // pred_fallthru
      _
    %v62 = vld [vmem:[#allocation2] sm:$0xff]
    %v63 = vld [vmem:[#allocation5] sm:$0xff]
    %v64 = vld [vmem:[#allocation5 + $0x8] sm:$0xff]
    %v65 = vld [vmem:[%s2] sm:$0x1]
    %v67 = vlaneseq
    %v68 = vshrl.u32 %v67, 7
    %v69 = vsub.s32 0, %v68
    %v70 = vrot.slane %v65, %v69
    %vm72 = vcmask 130048
    %v74 = vsel %vm72, %v62, 0
    %76 = vmatprep.subr.mxu0 0.0
    %77 = vmatpush1.msra.mxu0 0.0
    %78 = vmatprep.subr.mxu0 0.0
    %79 = vmatpush1.msra.mxu0 0.0
    %80 = vmatprep.subr.mxu0 0.0
    %81 = vmatpush1.msra.mxu0 0.0
    %82 = vmatprep.subr.mxu0 0.0
    %83 = vmatpush1.msra.mxu0 0.0
    %84 = vmatprep.subr.mxu0 0.0
    %85 = vmatpush1.msra.mxu0 0.0
    %86 = vmatprep.subr.mxu0 0.0
    %87 = vmatpush1.msra.mxu0 0.0
    %88 = vmatprep.subr.mxu0 0.0
    %89 = vmatpush1.msra.mxu0 0.0
    %90 = vmatprep.subr.mxu0 0.0
    %91 = vmatpush1.msra.mxu0 0.0
    %92 = vmatprep.subr.mxu0 0.0
    %93 = vmatpush1.msra.mxu0 0.0
    %94 = vmatprep.subr.mxu0 0.0
    %95 = vmatpush1.msra.mxu0 0.0
    %96 = vmatprep.subr.mxu0 0.0
    %97 = vmatpush1.msra.mxu0 0.0
    %98 = vmatprep.subr.mxu0 0.0
    %99 = vmatpush1.msra.mxu0 0.0
    %100 = vmatprep.subr.mxu0 0.0
    %101 = vmatpush1.msra.mxu0 0.0
    %102 = vmatprep.subr.mxu0 0.0
    %103 = vmatpush1.msra.mxu0 0.0
    %104 = vmatprep.subr.mxu0 0.0
    %105 = vmatpush1.msra.mxu0 %v64
    %106 = vmatprep.subr.mxu0 0.0
    %107 = vmatpush1.msra.mxu0 %v63
    %108 = vmatprep.subr.mxu0 0.0
    %109 = vmatpush2.msra.mxu0 0.0
    %110 = vmatprep.subr.mxu0 0.0
    %111 = vmatpush2.msra.mxu0 0.0
    %112 = vmatprep.subr.mxu0 0.0
    %113 = vmatpush2.msra.mxu0 0.0
    %114 = vmatprep.subr.mxu0 0.0
    %115 = vmatpush2.msra.mxu0 0.0
    %116 = vmatprep.subr.mxu0 0.0
    %117 = vmatpush2.msra.mxu0 0.0
    %118 = vmatprep.subr.mxu0 0.0
    %119 = vmatpush2.msra.mxu0 0.0
    %120 = vmatprep.subr.mxu0 0.0
    %121 = vmatpush2.msra.mxu0 0.0
    %122 = vmatprep.subr.mxu0 0.0
    %123 = vmatpush2.msra.mxu0 0.0
    %124 = vmatprep.subr.mxu0 0.0
    %125 = vmatpush2.msra.mxu0 0.0
    %126 = vmatprep.subr.mxu0 0.0
    %127 = vmatpush2.msra.mxu0 0.0
    %128 = vmatprep.subr.mxu0 0.0
    %129 = vmatpush2.msra.mxu0 0.0
    %130 = vmatprep.subr.mxu0 0.0
    %131 = vmatpush2.msra.mxu0 0.0
    %132 = vmatprep.subr.mxu0 0.0
    %133 = vmatpush2.msra.mxu0 0.0
    %134 = vmatprep.subr.mxu0 0.0
    %135 = vmatpush2.msra.mxu0 0.0
    %136 = vmatprep.subr.mxu0 0.0
    %137 = vmatpush2.msra.mxu0 0.0
    %138 = vmatprep.subr.mxu0 0.0
    %139 = vmatpush2.msra.mxu0 0.0
    %140 = vmatprep.mubr.f32.mxu0 0.0
    %141 = vmatmul.mubr.f32.gmra.mxu0 %v74
    %v142 = vpop.f32.mrf.mxu0
    %v143 = vadd.f32 %v70, %v142
    %v144 = vpop.f32.mrf.mxu0
    %145 = vdwg.mxu0
    %v146 = vmax.f32 %v143, 0.0
    %v147 = vld [vmem:[#allocation7] sm:$0xff]
    %v148 = vld [vmem:[#allocation7 + $0x8] sm:$0xff]
    %v149 = vld [vmem:[#allocation7 + $0x10] sm:$0xff]
    %v150 = vld [vmem:[#allocation7 + $0x18] sm:$0xff]
    %v151 = vld [vmem:[%s4] sm:$0x1]
    %v153 = vlaneseq
    %v154 = vshrl.u32 %v153, 7
    %v155 = vsub.s32 0, %v154
    %v156 = vrot.slane %v151, %v155
    %vm158 = vcmask 261120
    %v160 = vsel %vm158, %v146, 0
    %162 = vmatprep.subr.mxu0 0.0
    %163 = vmatpush1.msra.mxu0 0.0
    %164 = vmatprep.subr.mxu0 0.0
    %165 = vmatpush1.msra.mxu0 0.0
    %166 = vmatprep.subr.mxu0 0.0
    %167 = vmatpush1.msra.mxu0 0.0
    %168 = vmatprep.subr.mxu0 0.0
    %169 = vmatpush1.msra.mxu0 0.0
    %170 = vmatprep.subr.mxu0 0.0
    %171 = vmatpush1.msra.mxu0 0.0
    %172 = vmatprep.subr.mxu0 0.0
    %173 = vmatpush1.msra.mxu0 0.0
    %174 = vmatprep.subr.mxu0 0.0
    %175 = vmatpush1.msra.mxu0 0.0
    %176 = vmatprep.subr.mxu0 0.0
    %177 = vmatpush1.msra.mxu0 0.0
    %178 = vmatprep.subr.mxu0 0.0
    %179 = vmatpush1.msra.mxu0 0.0
    %180 = vmatprep.subr.mxu0 0.0
    %181 = vmatpush1.msra.mxu0 0.0
    %182 = vmatprep.subr.mxu0 0.0
    %183 = vmatpush1.msra.mxu0 0.0
    %184 = vmatprep.subr.mxu0 0.0
    %185 = vmatpush1.msra.mxu0 0.0
    %186 = vmatprep.subr.mxu0 0.0
    %187 = vmatpush1.msra.mxu0 %v150
    %188 = vmatprep.subr.mxu0 0.0
    %189 = vmatpush1.msra.mxu0 %v149
    %190 = vmatprep.subr.mxu0 0.0
    %191 = vmatpush1.msra.mxu0 %v148
    %192 = vmatprep.subr.mxu0 0.0
    %193 = vmatpush1.msra.mxu0 %v147
    %194 = vmatprep.subr.mxu0 0.0
    %195 = vmatpush2.msra.mxu0 0.0
    %196 = vmatprep.subr.mxu0 0.0
    %197 = vmatpush2.msra.mxu0 0.0
    %198 = vmatprep.subr.mxu0 0.0
    %199 = vmatpush2.msra.mxu0 0.0
    %200 = vmatprep.subr.mxu0 0.0
    %201 = vmatpush2.msra.mxu0 0.0
    %202 = vmatprep.subr.mxu0 0.0
    %203 = vmatpush2.msra.mxu0 0.0
    %204 = vmatprep.subr.mxu0 0.0
    %205 = vmatpush2.msra.mxu0 0.0
    %206 = vmatprep.subr.mxu0 0.0
    %207 = vmatpush2.msra.mxu0 0.0
    %208 = vmatprep.subr.mxu0 0.0
    %209 = vmatpush2.msra.mxu0 0.0
    %210 = vmatprep.subr.mxu0 0.0
    %211 = vmatpush2.msra.mxu0 0.0
    %212 = vmatprep.subr.mxu0 0.0
    %213 = vmatpush2.msra.mxu0 0.0
    %214 = vmatprep.subr.mxu0 0.0
    %215 = vmatpush2.msra.mxu0 0.0
    %216 = vmatprep.subr.mxu0 0.0
    %217 = vmatpush2.msra.mxu0 0.0
    %218 = vmatprep.subr.mxu0 0.0
    %219 = vmatpush2.msra.mxu0 0.0
    %220 = vmatprep.subr.mxu0 0.0
    %221 = vmatpush2.msra.mxu0 0.0
    %222 = vmatprep.subr.mxu0 0.0
    %223 = vmatpush2.msra.mxu0 0.0
    %224 = vmatprep.subr.mxu0 0.0
    %225 = vmatpush2.msra.mxu0 0.0
    %226 = vmatprep.mubr.f32.mxu0 0.0
    %227 = vmatmul.mubr.f32.gmra.mxu0 %v160
    %v228 = vpop.f32.mrf.mxu0
    %v229 = vadd.f32 %v156, %v228
    %v230 = vpop.f32.mrf.mxu0
    %231 = vdwg.mxu0
    %232 = vmax.xlane.f32.xlu0 %v229
    %v233 = vpop.xlane.xlu0 %232
    %v234 = vsub.f32 %v229, %v233
    %v235 = vmul.f32 %v234, 1.442695
    %v236 = vpow.pop %v235
    %237 = vadd.xlane.f32.xlu0 %v236
    %v238 = vpop.xlane.xlu0 %237
    %v239 = vrcp.pop %v238
    %v240 = vmul.f32 %v236, %v239
    %vm241 = vcmask 48128
    %242 = vst.msk [vmem:[#allocation8] sm:$0xff] %vm241, %v240
    // Predicated region
    $region34: #{tpu_custom_call.1} parent=1 // pred_check
      _
    $region35: #{tpu_custom_call.1} parent=1 // pred_check_branch
      %244 = sbr.rel (0) target = $region37
    $region36: #{tpu_custom_call.1} parent=1 // pred_region
      %s246 = ssub.s32 128, 32
      %247 = vsyncadd [#allocation4], %s246
      %s248 = sshll.u32 [#allocation8], 4
      %s249 = int_to_ptr.vmem [resolvable:$true] %s248
      %254 = dma.vmem_to_hbm [thread:$0]  %s249, 32, %s5, [#allocation4], 32, 32, 2
    $region37: #{tpu_custom_call.1} parent=1 // pred_fallthru
      _
    // Predicated region
    $region38: #{tpu_custom_call.1} parent=1 // pred_check
      _
    $region39: #{tpu_custom_call.1} parent=1 // pred_check_branch
      %256 = sbr.rel (0) target = $region41
    $region40: #{tpu_custom_call.1} parent=1 // pred_region
      %257 = dma.done [#allocation4], 128
    $region41: #{tpu_custom_call.1} parent=1 // pred_fallthru
      _
    %258 = vsyncpa [#allocation3], 1
    %259 = vsyncpa [#allocation6], 1
    %260 = vsyncpa [#allocation4], 1

</llo_original>
